<compile_context>
chip_gen: v5e
topology: v5e:2x2
jax: 0.10.0
libtpu: 0.0.40
codegen_flags: <defaults>
</compile_context>

<pallas_src>
import jax
import jax.numpy as jnp
from jax import lax
from jax.experimental import pallas as pl
from jax.experimental.pallas import tpu as pltpu


def _round_up(x, m):
    return (x + m - 1) // m * m


def _embbag_fc_kernel(ids_ref, start_ref, end_ref, inv_ref,
                      emb_ref, w_ref, b_ref, out_ref, hist_ref):
    """Grid = (bag_blocks, token_tiles); token axis (axis 1) is the reduction axis."""
    j = pl.program_id(1)

    @pl.when(j == 0)
    def _():
        hist_ref[...] = jnp.zeros_like(hist_ref)

    tb, vp = hist_ref.shape
    tt = ids_ref.shape[0]

    # --- segment matrix: seg[b, t] = 1/count_b if global token t belongs to bag b else 0 ---
    t0 = j * tt
    tok_idx = t0 + lax.broadcasted_iota(jnp.int32, (tb, tt), 1)          # (TB, TT)
    in_bag = (tok_idx >= start_ref[...]) & (tok_idx < end_ref[...])      # starts/ends (TB, 1)
    seg = jnp.where(in_bag, inv_ref[...], 0.0)                           # (TB, TT) f32

    # --- token one-hot over the (padded) vocab: onehot[t, v] = [ids[t] == v] ---
    ids = ids_ref[...]                                                   # (TT, 1) int32
    onehot = (ids == lax.broadcasted_iota(jnp.int32, (tt, vp), 1)).astype(jnp.float32)

    # --- accumulate the 1/count-weighted vocab histogram for this token tile (MXU) ---
    hist_ref[...] += jnp.dot(seg, onehot, preferred_element_type=jnp.float32)   # (TB, Vp)

    # --- finalize: bag means + fc as two small MXU matmuls, lane-dense (TB, Cp) store ---
    @pl.when(j == pl.num_programs(1) - 1)
    def _():
        means = jnp.dot(hist_ref[...], emb_ref[...],
                        preferred_element_type=jnp.float32)              # (TB, Dp)
        out = jnp.dot(means, w_ref[...],
                      preferred_element_type=jnp.float32) + b_ref[...]   # (TB, Cp)
        out_ref[...] = out.astype(out_ref.dtype)


def text_classification_forward(text, offsets, emb_table, fc_w, fc_b,
                                *, bag_block=8, token_tile=128):
    """text: (N,) int; offsets: (B,) int; emb_table: (V, D); fc_w: (C, D); fc_b: (C,)."""
    n_tokens = text.shape[0]
    batch = offsets.shape[0]
    vocab, embed_dim = emb_table.shape
    num_class = fc_w.shape[0]

    bp = _round_up(batch, bag_block)
    np_ = _round_up(max(n_tokens, 1), token_tile)
    vp = _round_up(vocab, 128)
    dp = _round_up(embed_dim, 128)
    cp = _round_up(num_class, 128)

    # Token ids, sublane-major (Np, 1); padding ids are 0 and are masked out by `seg`.
    ids = jnp.zeros((np_, 1), jnp.int32).at[:n_tokens, 0].set(text.astype(jnp.int32))

    starts_1d = offsets.astype(jnp.int32)
    ends_1d = jnp.concatenate([starts_1d[1:], jnp.array([n_tokens], jnp.int32)])
    counts = ends_1d - starts_1d
    inv_1d = jnp.where(counts > 0,
                       1.0 / jnp.maximum(counts, 1).astype(jnp.float32),
                       0.0)

    starts = jnp.zeros((bp, 1), jnp.int32).at[:batch, 0].set(starts_1d)
    ends = jnp.zeros((bp, 1), jnp.int32).at[:batch, 0].set(ends_1d)
    inv = jnp.zeros((bp, 1), jnp.float32).at[:batch, 0].set(inv_1d)

    # Zero-padded, lane-dense parameter layouts (fc weight pre-transposed to (D, C)).
    emb_p = jnp.zeros((vp, dp), jnp.float32).at[:vocab, :embed_dim].set(
        emb_table.astype(jnp.float32))
    w_t_p = jnp.zeros((dp, cp), jnp.float32).at[:embed_dim, :num_class].set(
        fc_w.T.astype(jnp.float32))
    b_p = jnp.zeros((1, cp), jnp.float32).at[0, :num_class].set(fc_b.astype(jnp.float32))

    grid = (bp // bag_block, np_ // token_tile)

    grid_spec = pltpu.PrefetchScalarGridSpec(
        num_scalar_prefetch=0,
        grid=grid,
        in_specs=[
            pl.BlockSpec((token_tile, 1), lambda i, j: (j, 0)),   # token ids
            pl.BlockSpec((bag_block, 1), lambda i, j: (i, 0)),    # bag starts
            pl.BlockSpec((bag_block, 1), lambda i, j: (i, 0)),    # bag ends
            pl.BlockSpec((bag_block, 1), lambda i, j: (i, 0)),    # 1/count per bag
            pl.BlockSpec((vp, dp), lambda i, j: (0, 0)),          # embedding table
            pl.BlockSpec((dp, cp), lambda i, j: (0, 0)),          # fc weight (D, C)
            pl.BlockSpec((1, cp), lambda i, j: (0, 0)),           # fc bias
        ],
        out_specs=pl.BlockSpec((bag_block, cp), lambda i, j: (i, 0)),
        scratch_shapes=[pltpu.VMEM((bag_block, vp), jnp.float32)],   # vocab histogram
    )

    out_padded = pl.pallas_call(
        _embbag_fc_kernel,
        out_shape=jax.ShapeDtypeStruct((bp, cp), jnp.float32),
        grid_spec=grid_spec,
        compiler_params=pltpu.CompilerParams(
            dimension_semantics=("parallel", "arbitrary"),
            vmem_limit_bytes=32 * 1024 * 1024),
    )(ids, starts, ends, inv, emb_p, w_t_p, b_p)

    return out_padded[:batch, :num_class]


def _reference(text, offsets, emb_table, fc_w, fc_b):
    """Plain-JAX reference replicating nn.EmbeddingBag(mode='mean') + nn.Linear."""
    n = text.shape[0]
    batch = offsets.shape[0]
    ends = jnp.concatenate([offsets[1:], jnp.array([n], offsets.dtype)])
    outs = []
    for i in range(batch):
        s, e = int(offsets[i]), int(ends[i])
        if e > s:
            bag = emb_table[text[s:e]].mean(axis=0)
        else:
            bag = jnp.zeros((emb_table.shape[1],), emb_table.dtype)
        outs.append(bag)
    embedded = jnp.stack(outs)
    return embedded @ fc_w.T + fc_b


if __name__ == "__main__":
    vocab_size, embed_dim, num_class = 50, 32, 8
    batch = 4

    key = jax.random.PRNGKey(0)
    k_emb, k_w, k_tok = jax.random.split(key, 3)

    # init_weights(): uniform(-0.5, 0.5) for embedding + fc weight, zeros for fc bias.
    initrange = 0.5
    emb_table = jax.random.uniform(k_emb, (vocab_size, embed_dim),
                                   jnp.float32, -initrange, initrange)
    fc_w = jax.random.uniform(k_w, (num_class, embed_dim),
                              jnp.float32, -initrange, initrange)
    fc_b = jnp.zeros((num_class,), jnp.float32)

    # Flat token stream of 4 bags with lengths 5, 4, 5, 6.
    n_tokens = 20
    text = jax.random.randint(k_tok, (n_tokens,), 0, vocab_size, jnp.int32)
    offsets = jnp.array([0, 5, 9, 14], jnp.int32)

    out = text_classification_forward(text, offsets, emb_table, fc_w, fc_b)
    out = jax.block_until_ready(out)

    ref = _reference(text, offsets, emb_table, fc_w, fc_b)
    assert out.shape == (batch, num_class)
    assert jnp.allclose(out, ref, atol=1e-4, rtol=1e-4), (out, ref)

    print("KERNEL_OK")
</pallas_src>

<mosaic_0001>
module attributes {stable_mosaic.version = 11 : i64} {
  func.func @_embbag_fc_kernel(%arg0: i32, %arg1: i32, %arg2: memref<128x1xi32, #tpu.memory_space<vmem>>, %arg3: memref<8x1xi32, #tpu.memory_space<vmem>>, %arg4: memref<8x1xi32, #tpu.memory_space<vmem>>, %arg5: memref<8x1xf32, #tpu.memory_space<vmem>>, %arg6: memref<128x128xf32, #tpu.memory_space<vmem>>, %arg7: memref<128x128xf32, #tpu.memory_space<vmem>>, %arg8: memref<1x128xf32, #tpu.memory_space<vmem>>, %arg9: memref<8x128xf32, #tpu.memory_space<vmem>>, %arg10: memref<8x128xf32, #tpu.memory_space<vmem>>) attributes {dimension_semantics = [#tpu.dimension_semantics<parallel>, #tpu.dimension_semantics<arbitrary>], iteration_bounds = array<i64: 1, 1>, scalar_prefetch = 0 : i64, scratch_operands = 1 : i64, tpu.core_type = #tpu.core_type<tc>, window_params = [{transform_indices = @transform_0, window_bounds = array<i64: 128, 1>}, {transform_indices = @transform_1, window_bounds = array<i64: 8, 1>}, {transform_indices = @transform_2, window_bounds = array<i64: 8, 1>}, {transform_indices = @transform_3, window_bounds = array<i64: 8, 1>}, {pipeline_mode = #tpu.pipeline_mode<synchronous>, transform_indices = @transform_4, window_bounds = array<i64: 128, 128>}, {pipeline_mode = #tpu.pipeline_mode<synchronous>, transform_indices = @transform_5, window_bounds = array<i64: 128, 128>}, {pipeline_mode = #tpu.pipeline_mode<synchronous>, transform_indices = @transform_6, window_bounds = array<i64: 1, 128>}, {transform_indices = @transform_7, window_bounds = array<i64: 8, 128>}]} {
    %c0_i32 = arith.constant 0 : i32
    %0 = arith.cmpi eq, %arg1, %c0_i32 : i32
    %1 = arith.extui %0 : i1 to i32
    %c0_i32_0 = arith.constant 0 : i32
    %2 = arith.cmpi ne, %1, %c0_i32_0 : i32
    scf.if %2 {
      %cst_15 = arith.constant 0.000000e+00 : f32
      %32 = vector.broadcast %cst_15 : f32 to vector<8x128xf32>
      %c0_16 = arith.constant 0 : index
      %c0_17 = arith.constant 0 : index
      %33 = vector.load %arg10[%c0_16, %c0_17] : memref<8x128xf32, #tpu.memory_space<vmem>>, vector<8x128xf32>
      tpu.vector_store %arg10[%c0_16, %c0_17], %32 {strides = array<i32>} : memref<8x128xf32, #tpu.memory_space<vmem>>, vector<8x128xf32>,
    } else {
    }
    %c128_i32 = arith.constant 128 : i32
    %3 = arith.muli %arg1, %c128_i32 : i32
    %4 = tpu.iota {dimensions = array<i32: 1>} : vector<8x128xi32>
    %5 = vector.broadcast %3 : i32 to vector<8x128xi32>
    %6 = arith.addi %5, %4 : vector<8x128xi32>
    %c0 = arith.constant 0 : index
    %c0_1 = arith.constant 0 : index
    %7 = vector.load %arg3[%c0, %c0_1] : memref<8x1xi32, #tpu.memory_space<vmem>>, vector<8x1xi32>
    %8 = vector.broadcast %7 : vector<8x1xi32> to vector<8x128xi32>
    %9 = arith.cmpi sge, %6, %8 : vector<8x128xi32>
    %c0_2 = arith.constant 0 : index
    %c0_3 = arith.constant 0 : index
    %10 = vector.load %arg4[%c0_2, %c0_3] : memref<8x1xi32, #tpu.memory_space<vmem>>, vector<8x1xi32>
    %11 = vector.broadcast %10 : vector<8x1xi32> to vector<8x128xi32>
    %12 = arith.cmpi slt, %6, %11 : vector<8x128xi32>
    %13 = arith.andi %9, %12 : vector<8x128xi1>
    %c0_4 = arith.constant 0 : index
    %c0_5 = arith.constant 0 : index
    %14 = vector.load %arg5[%c0_4, %c0_5] : memref<8x1xf32, #tpu.memory_space<vmem>>, vector<8x1xf32>
    %cst = arith.constant 0.000000e+00 : f32
    %15 = vector.shape_cast %14 : vector<8x1xf32> to vector<8x1xf32>
    %16 = vector.broadcast %15 : vector<8x1xf32> to vector<8x128xf32>
    %17 = vector.broadcast %cst : f32 to vector<8x128xf32>
    %18 = arith.select %13, %16, %17 : vector<8x128xi1>, vector<8x128xf32>
    %c0_6 = arith.constant 0 : index
    %c0_7 = arith.constant 0 : index
    %19 = vector.load %arg2[%c0_6, %c0_7] : memref<128x1xi32, #tpu.memory_space<vmem>>, vector<128x1xi32>
    %20 = tpu.iota {dimensions = array<i32: 1>} : vector<128x128xi32>
    %21 = vector.broadcast %19 : vector<128x1xi32> to vector<128x128xi32>
    %22 = arith.cmpi eq, %21, %20 : vector<128x128xi32>
    %23 = arith.extui %22 : vector<128x128xi1> to vector<128x128xi32>
    %24 = arith.sitofp %23 : vector<128x128xi32> to vector<128x128xf32>
    %c0_8 = arith.constant 0 : index
    %c0_9 = arith.constant 0 : index
    %25 = vector.load %arg10[%c0_8, %c0_9] : memref<8x128xf32, #tpu.memory_space<vmem>>, vector<8x128xf32>
    %cst_10 = arith.constant dense<0.000000e+00> : vector<8x128xf32>
    %26 = tpu.matmul %18, %24, %cst_10 {dimension_numbers = #tpu.dot_dimension_numbers<[1], [0], [0], [1], [0, 0, 1, 1], [], []>} : vector<8x128xf32>, vector<128x128xf32>, vector<8x128xf32> -> vector<8x128xf32>
    %27 = arith.addf %25, %26 : vector<8x128xf32>
    %c0_11 = arith.constant 0 : index
    %c0_12 = arith.constant 0 : index
    %28 = vector.load %arg10[%c0_11, %c0_12] : memref<8x128xf32, #tpu.memory_space<vmem>>, vector<8x128xf32>
    tpu.vector_store %arg10[%c0_11, %c0_12], %27 {strides = array<i32>} : memref<8x128xf32, #tpu.memory_space<vmem>>, vector<8x128xf32>,
    %c0_i32_13 = arith.constant 0 : i32
    %29 = arith.cmpi eq, %arg1, %c0_i32_13 : i32
    %30 = arith.extui %29 : i1 to i32
    %c0_i32_14 = arith.constant 0 : i32
    %31 = arith.cmpi ne, %30, %c0_i32_14 : i32
    scf.if %31 {
      %c0_15 = arith.constant 0 : index
      %c0_16 = arith.constant 0 : index
      %32 = vector.load %arg10[%c0_15, %c0_16] : memref<8x128xf32, #tpu.memory_space<vmem>>, vector<8x128xf32>
      %c0_17 = arith.constant 0 : index
      %c0_18 = arith.constant 0 : index
      %33 = vector.load %arg6[%c0_17, %c0_18] : memref<128x128xf32, #tpu.memory_space<vmem>>, vector<128x128xf32>
      %cst_19 = arith.constant dense<0.000000e+00> : vector<8x128xf32>
      %34 = tpu.matmul %32, %33, %cst_19 {dimension_numbers = #tpu.dot_dimension_numbers<[1], [0], [0], [1], [0, 0, 1, 1], [], []>} : vector<8x128xf32>, vector<128x128xf32>, vector<8x128xf32> -> vector<8x128xf32>
      %c0_20 = arith.constant 0 : index
      %c0_21 = arith.constant 0 : index
      %35 = vector.load %arg7[%c0_20, %c0_21] : memref<128x128xf32, #tpu.memory_space<vmem>>, vector<128x128xf32>
      %cst_22 = arith.constant dense<0.000000e+00> : vector<8x128xf32>
      %36 = tpu.matmul %34, %35, %cst_22 {dimension_numbers = #tpu.dot_dimension_numbers<[1], [0], [0], [1], [0, 0, 1, 1], [], []>} : vector<8x128xf32>, vector<128x128xf32>, vector<8x128xf32> -> vector<8x128xf32>
      %c0_23 = arith.constant 0 : index
      %c0_24 = arith.constant 0 : index
      %37 = vector.load %arg8[%c0_23, %c0_24] : memref<1x128xf32, #tpu.memory_space<vmem>>, vector<1x128xf32>
      %38 = vector.broadcast %37 : vector<1x128xf32> to vector<8x128xf32>
      %39 = arith.addf %36, %38 : vector<8x128xf32>
      %c0_25 = arith.constant 0 : index
      %c0_26 = arith.constant 0 : index
      %40 = vector.load %arg9[%c0_25, %c0_26] : memref<8x128xf32, #tpu.memory_space<vmem>>, vector<8x128xf32>
      tpu.vector_store %arg9[%c0_25, %c0_26], %39 {strides = array<i32>} : memref<8x128xf32, #tpu.memory_space<vmem>>, vector<8x128xf32>,
    } else {
    }
    return
  }
  func.func @transform_0(%arg0: i32, %arg1: i32) -> (i32, i32) {
    %c0_i32 = arith.constant 0 : i32
    %c0_i32_0 = arith.constant 0 : i32
    return %arg1, %c0_i32 : i32, i32
  }
  func.func @transform_1(%arg0: i32, %arg1: i32) -> (i32, i32) {
    %c0_i32 = arith.constant 0 : i32
    %c0_i32_0 = arith.constant 0 : i32
    return %arg0, %c0_i32 : i32, i32
  }
  func.func @transform_2(%arg0: i32, %arg1: i32) -> (i32, i32) {
    %c0_i32 = arith.constant 0 : i32
    %c0_i32_0 = arith.constant 0 : i32
    return %arg0, %c0_i32 : i32, i32
  }
  func.func @transform_3(%arg0: i32, %arg1: i32) -> (i32, i32) {
    %c0_i32 = arith.constant 0 : i32
    %c0_i32_0 = arith.constant 0 : i32
    return %arg0, %c0_i32 : i32, i32
  }
  func.func @transform_4(%arg0: i32, %arg1: i32) -> (i32, i32) {
    %c0_i32 = arith.constant 0 : i32
    %c0_i32_0 = arith.constant 0 : i32
    %c0_i32_1 = arith.constant 0 : i32
    return %c0_i32, %c0_i32_0 : i32, i32
  }
  func.func @transform_5(%arg0: i32, %arg1: i32) -> (i32, i32) {
    %c0_i32 = arith.constant 0 : i32
    %c0_i32_0 = arith.constant 0 : i32
    %c0_i32_1 = arith.constant 0 : i32
    return %c0_i32, %c0_i32_0 : i32, i32
  }
  func.func @transform_6(%arg0: i32, %arg1: i32) -> (i32, i32) {
    %c0_i32 = arith.constant 0 : i32
    %c0_i32_0 = arith.constant 0 : i32
    %c0_i32_1 = arith.constant 0 : i32
    return %c0_i32, %c0_i32_0 : i32, i32
  }
  func.func @transform_7(%arg0: i32, %arg1: i32) -> (i32, i32) {
    %c0_i32 = arith.constant 0 : i32
    %c0_i32_0 = arith.constant 0 : i32
    return %arg0, %c0_i32 : i32, i32
  }
}

</mosaic_0001>

<llo_original>
// kernel: tpu_custom_call.1
$region0: #{tpu_custom_call.1}
  #allocation0 [shape = 'u32[]', space=smem, size = 0x4, offset = 0x4, fixed_abs, tag = 'smem constant byte address 0x4 - core index']
  #allocation1 [shape = 'u32[72,128]{1,0:T(1,128)}', space=vmem, size = 0x9000, scoped, tag = 'internal scratch']
  #allocation2 [shape = 'f32[8,128]{1,0:T(8,128)}', space=vmem, size = 0x1000, scoped, tag = 'scratch operand']
  %s0 = inlined_call_operand.vmem [shape: s32[128,1], index: 0, kind: input, shape index: {}]
  %s1 = inlined_call_operand.vmem [shape: s32[8,1], index: 1, kind: input, shape index: {}]
  %s2 = inlined_call_operand.vmem [shape: s32[8,1], index: 2, kind: input, shape index: {}]
  %s3 = inlined_call_operand.vmem [shape: f32[8,1], index: 3, kind: input, shape index: {}]
  %s4 = inlined_call_operand.vmem [shape: f32[128,128], index: 4, kind: input, shape index: {}]
  %s5 = inlined_call_operand.hbm [shape: f32[128,128], index: 5, kind: input, shape index: {}]
  %s6 = inlined_call_operand.vmem [shape: f32[1,128], index: 6, kind: input, shape index: {}]
  %s7 = inlined_call_operand.hbm [shape: f32[8,128], index: 7, kind: output, shape index: {}]
  %s8 = sld [smem:[#allocation0]]
  $region50: #{tpu_custom_call.1} parent=0
    _
  %s10 = ssub.s32 1, %s8
  %s11 = scalar_select 0, %s10, %s8
  $region1: #{tpu_custom_call.1} parent=0
    #allocation3 [shape = 'u8[65536]{0}', space=vmem, size = 0x10000, scoped, tag = 'input window, operand 5, single buffered']
    #allocation4 [shape = 's32[1]{0}', space=sflag, size = 0x4, scoped, tag = 'scoped memory for tpu_custom_call.1']
    #allocation5 [shape = 's32[1]{0}', space=sflag, size = 0x4, scoped, tag = 'scoped memory for tpu_custom_call.1']
    #allocation6 [shape = 'u8[4096]{0}', space=vmem, size = 0x1000, scoped, tag = 'output window, operand 0, single buffered']
    %12 = vsyncpa [#allocation4], 0
    %13 = vsyncpa [#allocation5], 0
    // Predicated region
    $region2: #{tpu_custom_call.1} parent=1 // pred_check
      _
    $region3: #{tpu_custom_call.1} parent=1 // pred_check_branch
      %15 = sbr.rel (0) target = $region5
    $region4: #{tpu_custom_call.1} parent=1 // pred_region
      _
    $region5: #{tpu_custom_call.1} parent=1 // pred_fallthru
      _
    // Predicated region
    $region6: #{tpu_custom_call.1} parent=1 // pred_check
      _
    $region7: #{tpu_custom_call.1} parent=1 // pred_check_branch
      %17 = sbr.rel (0) target = $region9
    $region8: #{tpu_custom_call.1} parent=1 // pred_region
      _
    $region9: #{tpu_custom_call.1} parent=1 // pred_fallthru
      _
    // Predicated region
    $region10: #{tpu_custom_call.1} parent=1 // pred_check
      _
    $region11: #{tpu_custom_call.1} parent=1 // pred_check_branch
      %19 = sbr.rel (0) target = $region13
    $region12: #{tpu_custom_call.1} parent=1 // pred_region
      _
    $region13: #{tpu_custom_call.1} parent=1 // pred_fallthru
      _
    // Predicated region
    $region14: #{tpu_custom_call.1} parent=1 // pred_check
      _
    $region15: #{tpu_custom_call.1} parent=1 // pred_check_branch
      %21 = sbr.rel (0) target = $region17
    $region16: #{tpu_custom_call.1} parent=1 // pred_region
      _
    $region17: #{tpu_custom_call.1} parent=1 // pred_fallthru
      _
    // Predicated region
    $region18: #{tpu_custom_call.1} parent=1 // pred_check
      _
    $region19: #{tpu_custom_call.1} parent=1 // pred_check_branch
      %23 = sbr.rel (0) target = $region21
    $region20: #{tpu_custom_call.1} parent=1 // pred_region
      _
    $region21: #{tpu_custom_call.1} parent=1 // pred_fallthru
      _
    // Predicated region
    $region22: #{tpu_custom_call.1} parent=1 // pred_check
      _
    $region23: #{tpu_custom_call.1} parent=1 // pred_check_branch
      %25 = sbr.rel (0) target = $region25
    $region24: #{tpu_custom_call.1} parent=1 // pred_region
      %27 = vsyncadd [#allocation4], 0
      %s28 = sshll.u32 %s5, 4
      %s29 = int_to_ptr.hbm [resolvable:$true] %s28
      %s30 = sshll.u32 [#allocation3], 4
      %s31 = int_to_ptr.vmem [resolvable:$true] %s30
      %36 = dma.hbm_to_vmem [thread:$0]  %s29, 2048, %s31, [#allocation4], 128, 128, 8
    $region25: #{tpu_custom_call.1} parent=1 // pred_fallthru
      _
    // Predicated region
    $region26: #{tpu_custom_call.1} parent=1 // pred_check
      _
    $region27: #{tpu_custom_call.1} parent=1 // pred_check_branch
      %38 = sbr.rel (0) target = $region29
    $region28: #{tpu_custom_call.1} parent=1 // pred_region
      _
    $region29: #{tpu_custom_call.1} parent=1 // pred_fallthru
      _
    // Predicated region
    $region30: #{tpu_custom_call.1} parent=1 // pred_check
      _
    $region31: #{tpu_custom_call.1} parent=1 // pred_check_branch
      %40 = sbr.rel (0) target = $region33
    $region32: #{tpu_custom_call.1} parent=1 // pred_region
      %42 = dma.done [#allocation4], 2048
    $region33: #{tpu_custom_call.1} parent=1 // pred_fallthru
      _
    %p43 = scmp.eq.s32.totalorder 0, 0
    // Predicated region
    $region34: #{tpu_custom_call.1} parent=1 // pred_check
      %p44 = pneg %p43
    $region35: #{tpu_custom_call.1} parent=1 // pred_check_branch
      %46 = sbr.rel (%p44) target = $region37
    $region36: #{tpu_custom_call.1} parent=1 // pred_region
      %47 = vst [vmem:[#allocation2] sm:$0xff] 0.0
    $region37: #{tpu_custom_call.1} parent=1 // pred_fallthru
      _
    %s48 = smul.u32 0, 128
    %v49 = vlaneseq
    %v50 = vand.u32 %v49, 127
    %v51 = vstv %s48
    %v52 = vadd.s32 %v51, %v50
    %v53 = vld [vmem:[%s1] sm:$0xff]
    %54 = vset.pattern.permute.xlu0 0
    %55 = vperm.xlu0 %54, %v53
    %v56 = vpop.permute.xlu0 %55
    %vm57 = vcmp.ge.s32.totalorder %v52, %v56
    %v58 = vld [vmem:[%s2] sm:$0xff]
    %59 = vset.pattern.permute.xlu0 0
    %60 = vperm.xlu0 %59, %v58
    %v61 = vpop.permute.xlu0 %60
    %vm62 = vcmp.lt.s32.totalorder %v52, %v61
    %vm63 = vmand %vm57, %vm62
    %v64 = vld [vmem:[%s3] sm:$0xff]
    %66 = vset.pattern.permute.xlu0 0
    %67 = vperm.xlu0 %66, %v64
    %v68 = vpop.permute.xlu0 %67
    %v70 = vsel %vm63, %v68, 0.0
    %v71 = vld [vmem:[%s0] sm:$0xff]
    %v72 = vld [vmem:[%s0 + $0x8] sm:$0xff]
    %v73 = vld [vmem:[%s0 + $0x10] sm:$0xff]
    %v74 = vld [vmem:[%s0 + $0x18] sm:$0xff]
    %v75 = vld [vmem:[%s0 + $0x20] sm:$0xff]
    %v76 = vld [vmem:[%s0 + $0x28] sm:$0xff]
    %v77 = vld [vmem:[%s0 + $0x30] sm:$0xff]
    %v78 = vld [vmem:[%s0 + $0x38] sm:$0xff]
    %v79 = vld [vmem:[%s0 + $0x40] sm:$0xff]
    %v80 = vld [vmem:[%s0 + $0x48] sm:$0xff]
    %v81 = vld [vmem:[%s0 + $0x50] sm:$0xff]
    %v82 = vld [vmem:[%s0 + $0x58] sm:$0xff]
    %v83 = vld [vmem:[%s0 + $0x60] sm:$0xff]
    %v84 = vld [vmem:[%s0 + $0x68] sm:$0xff]
    %v85 = vld [vmem:[%s0 + $0x70] sm:$0xff]
    %v86 = vld [vmem:[%s0 + $0x78] sm:$0xff]
    %87 = vset.pattern.permute.xlu0 0
    %88 = vperm.xlu0 %87, %v71
    %v89 = vpop.permute.xlu0 %88
    %90 = vset.pattern.permute.xlu0 0
    %91 = vperm.xlu0 %90, %v72
    %v92 = vpop.permute.xlu0 %91
    %93 = vset.pattern.permute.xlu0 0
    %94 = vperm.xlu0 %93, %v73
    %v95 = vpop.permute.xlu0 %94
    %96 = vset.pattern.permute.xlu0 0
    %97 = vperm.xlu0 %96, %v74
    %v98 = vpop.permute.xlu0 %97
    %99 = vset.pattern.permute.xlu0 0
    %100 = vperm.xlu0 %99, %v75
    %v101 = vpop.permute.xlu0 %100
    %102 = vset.pattern.permute.xlu0 0
    %103 = vperm.xlu0 %102, %v76
    %v104 = vpop.permute.xlu0 %103
    %105 = vset.pattern.permute.xlu0 0
    %106 = vperm.xlu0 %105, %v77
    %v107 = vpop.permute.xlu0 %106
    %108 = vset.pattern.permute.xlu0 0
    %109 = vperm.xlu0 %108, %v78
    %v110 = vpop.permute.xlu0 %109
    %111 = vset.pattern.permute.xlu0 0
    %112 = vperm.xlu0 %111, %v79
    %v113 = vpop.permute.xlu0 %112
    %114 = vset.pattern.permute.xlu0 0
    %115 = vperm.xlu0 %114, %v80
    %v116 = vpop.permute.xlu0 %115
    %117 = vset.pattern.permute.xlu0 0
    %118 = vperm.xlu0 %117, %v81
    %v119 = vpop.permute.xlu0 %118
    %120 = vset.pattern.permute.xlu0 0
    %121 = vperm.xlu0 %120, %v82
    %v122 = vpop.permute.xlu0 %121
    %123 = vset.pattern.permute.xlu0 0
    %124 = vperm.xlu0 %123, %v83
    %v125 = vpop.permute.xlu0 %124
    %126 = vset.pattern.permute.xlu0 0
    %127 = vperm.xlu0 %126, %v84
    %v128 = vpop.permute.xlu0 %127
    %129 = vset.pattern.permute.xlu0 0
    %130 = vperm.xlu0 %129, %v85
    %v131 = vpop.permute.xlu0 %130
    %132 = vset.pattern.permute.xlu0 0
    %133 = vperm.xlu0 %132, %v86
    %v134 = vpop.permute.xlu0 %133
    %vm135 = vcmp.eq.s32.totalorder %v89, %v50
    %vm136 = vcmp.eq.s32.totalorder %v92, %v50
    %vm137 = vcmp.eq.s32.totalorder %v95, %v50
    %vm138 = vcmp.eq.s32.totalorder %v98, %v50
    %vm139 = vcmp.eq.s32.totalorder %v101, %v50
    %vm140 = vcmp.eq.s32.totalorder %v104, %v50
    %vm141 = vcmp.eq.s32.totalorder %v107, %v50
    %vm142 = vcmp.eq.s32.totalorder %v110, %v50
    %vm143 = vcmp.eq.s32.totalorder %v113, %v50
    %vm144 = vcmp.eq.s32.totalorder %v116, %v50
    %vm145 = vcmp.eq.s32.totalorder %v119, %v50
    %vm146 = vcmp.eq.s32.totalorder %v122, %v50
    %vm147 = vcmp.eq.s32.totalorder %v125, %v50
    %vm148 = vcmp.eq.s32.totalorder %v128, %v50
    %vm149 = vcmp.eq.s32.totalorder %v131, %v50
    %vm150 = vcmp.eq.s32.totalorder %v134, %v50
    %v151 = vsel %vm135, 1, 0
    %v152 = vsel %vm136, 1, 0
    %v153 = vsel %vm137, 1, 0
    %v154 = vsel %vm138, 1, 0
    %v155 = vsel %vm139, 1, 0
    %v156 = vsel %vm140, 1, 0
    %v157 = vsel %vm141, 1, 0
    %v158 = vsel %vm142, 1, 0
    %v159 = vsel %vm143, 1, 0
    %v160 = vsel %vm144, 1, 0
    %v161 = vsel %vm145, 1, 0
    %v162 = vsel %vm146, 1, 0
    %v163 = vsel %vm147, 1, 0
    %v164 = vsel %vm148, 1, 0
    %v165 = vsel %vm149, 1, 0
    %v166 = vsel %vm150, 1, 0
    %v167 = vcvt.s32.f32 %v151
    %v168 = vcvt.s32.f32 %v152
    %v169 = vcvt.s32.f32 %v153
    %v170 = vcvt.s32.f32 %v154
    %v171 = vcvt.s32.f32 %v155
    %v172 = vcvt.s32.f32 %v156
    %v173 = vcvt.s32.f32 %v157
    %v174 = vcvt.s32.f32 %v158
    %v175 = vcvt.s32.f32 %v159
    %v176 = vcvt.s32.f32 %v160
    %v177 = vcvt.s32.f32 %v161
    %v178 = vcvt.s32.f32 %v162
    %v179 = vcvt.s32.f32 %v163
    %v180 = vcvt.s32.f32 %v164
    %v181 = vcvt.s32.f32 %v165
    %v182 = vcvt.s32.f32 %v166
    %v183 = vld [vmem:[#allocation2] sm:$0xff]
    %184 = vmatpush.msra.mxu0 %v182
    %185 = vmatpush.msra.mxu0 %v181
    %186 = vmatpush.msra.mxu0 %v180
    %187 = vmatpush.msra.mxu0 %v179
    %188 = vmatpush.msra.mxu0 %v178
    %189 = vmatpush.msra.mxu0 %v177
    %190 = vmatpush.msra.mxu0 %v176
    %191 = vmatpush.msra.mxu0 %v175
    %192 = vmatpush.msra.mxu0 %v174
    %193 = vmatpush.msra.mxu0 %v173
    %194 = vmatpush.msra.mxu0 %v172
    %195 = vmatpush.msra.mxu0 %v171
    %196 = vmatpush.msra.mxu0 %v170
    %197 = vmatpush.msra.mxu0 %v169
    %198 = vmatpush.msra.mxu0 %v168
    %199 = vmatpush.msra.mxu0 %v167
    %200 = vmatmul.f32.gmra.mxu0 %v70
    %v201 = vpop.f32.mrf.mxu0
    %v202 = vadd.f32 0.0, %v201
    %203 = vdwg.mxu0
    %v204 = vadd.f32 %v183, %v202
    %205 = vst [vmem:[#allocation2] sm:$0xff] %v204
    // Predicated region
    $region38: #{tpu_custom_call.1} parent=1 // pred_check
      %p206 = pneg %p43
    $region39: #{tpu_custom_call.1} parent=1 // pred_check_branch
      %208 = sbr.rel (%p206) target = $region41
    $region40: #{tpu_custom_call.1} parent=1 // pred_region
      %v209 = vld [vmem:[#allocation2] sm:$0xff]
      %v210 = vld [vmem:[%s4] sm:$0xff]
      %v211 = vld [vmem:[%s4 + $0x8] sm:$0xff]
      %v212 = vld [vmem:[%s4 + $0x10] sm:$0xff]
      %v213 = vld [vmem:[%s4 + $0x18] sm:$0xff]
      %v214 = vld [vmem:[%s4 + $0x20] sm:$0xff]
      %v215 = vld [vmem:[%s4 + $0x28] sm:$0xff]
      %v216 = vld [vmem:[%s4 + $0x30] sm:$0xff]
      %v217 = vld [vmem:[%s4 + $0x38] sm:$0xff]
      %v218 = vld [vmem:[%s4 + $0x40] sm:$0xff]
      %v219 = vld [vmem:[%s4 + $0x48] sm:$0xff]
      %v220 = vld [vmem:[%s4 + $0x50] sm:$0xff]
      %v221 = vld [vmem:[%s4 + $0x58] sm:$0xff]
      %v222 = vld [vmem:[%s4 + $0x60] sm:$0xff]
      %v223 = vld [vmem:[%s4 + $0x68] sm:$0xff]
      %v224 = vld [vmem:[%s4 + $0x70] sm:$0xff]
      %v225 = vld [vmem:[%s4 + $0x78] sm:$0xff]
      %226 = vmatpush.msra.mxu0 %v225
      %227 = vmatpush.msra.mxu0 %v224
      %228 = vmatpush.msra.mxu0 %v223
      %229 = vmatpush.msra.mxu0 %v222
      %230 = vmatpush.msra.mxu0 %v221
      %231 = vmatpush.msra.mxu0 %v220
      %232 = vmatpush.msra.mxu0 %v219
      %233 = vmatpush.msra.mxu0 %v218
      %234 = vmatpush.msra.mxu0 %v217
      %235 = vmatpush.msra.mxu0 %v216
      %236 = vmatpush.msra.mxu0 %v215
      %237 = vmatpush.msra.mxu0 %v214
      %238 = vmatpush.msra.mxu0 %v213
      %239 = vmatpush.msra.mxu0 %v212
      %240 = vmatpush.msra.mxu0 %v211
      %241 = vmatpush.msra.mxu0 %v210
      %242 = vmatmul.f32.gmra.mxu0 %v209
      %v243 = vpop.f32.mrf.mxu0
      %v244 = vadd.f32 0.0, %v243
      %245 = vdwg.mxu0
      %v246 = vld [vmem:[#allocation3] sm:$0xff]
      %v247 = vld [vmem:[#allocation3 + $0x8] sm:$0xff]
      %v248 = vld [vmem:[#allocation3 + $0x10] sm:$0xff]
      %v249 = vld [vmem:[#allocation3 + $0x18] sm:$0xff]
      %v250 = vld [vmem:[#allocation3 + $0x20] sm:$0xff]
      %v251 = vld [vmem:[#allocation3 + $0x28] sm:$0xff]
      %v252 = vld [vmem:[#allocation3 + $0x30] sm:$0xff]
      %v253 = vld [vmem:[#allocation3 + $0x38] sm:$0xff]
      %v254 = vld [vmem:[#allocation3 + $0x40] sm:$0xff]
      %v255 = vld [vmem:[#allocation3 + $0x48] sm:$0xff]
      %v256 = vld [vmem:[#allocation3 + $0x50] sm:$0xff]
      %v257 = vld [vmem:[#allocation3 + $0x58] sm:$0xff]
      %v258 = vld [vmem:[#allocation3 + $0x60] sm:$0xff]
      %v259 = vld [vmem:[#allocation3 + $0x68] sm:$0xff]
      %v260 = vld [vmem:[#allocation3 + $0x70] sm:$0xff]
      %v261 = vld [vmem:[#allocation3 + $0x78] sm:$0xff]
      %v262 = vld [vmem:[%s6] sm:$0x1]
      %v264 = vperm.slane %v262, 0
      %266 = vmatpush.msra.mxu0 %v261
      %267 = vmatpush.msra.mxu0 %v260
      %268 = vmatpush.msra.mxu0 %v259
      %269 = vmatpush.msra.mxu0 %v258
      %270 = vmatpush.msra.mxu0 %v257
      %271 = vmatpush.msra.mxu0 %v256
      %272 = vmatpush.msra.mxu0 %v255
      %273 = vmatpush.msra.mxu0 %v254
      %274 = vmatpush.msra.mxu0 %v253
      %275 = vmatpush.msra.mxu0 %v252
      %276 = vmatpush.msra.mxu0 %v251
      %277 = vmatpush.msra.mxu0 %v250
      %278 = vmatpush.msra.mxu0 %v249
      %279 = vmatpush.msra.mxu0 %v248
      %280 = vmatpush.msra.mxu0 %v247
      %281 = vmatpush.msra.mxu0 %v246
      %282 = vmatmul.f32.gmra.mxu0 %v244
      %v283 = vpop.f32.mrf.mxu0
      %v284 = vadd.f32 %v264, %v283
      %285 = vdwg.mxu0
      %286 = vst [vmem:[#allocation6] sm:$0xff] %v284
    $region41: #{tpu_custom_call.1} parent=1 // pred_fallthru
      _
    // Predicated region
    $region42: #{tpu_custom_call.1} parent=1 // pred_check
      _
    $region43: #{tpu_custom_call.1} parent=1 // pred_check_branch
      %288 = sbr.rel (0) target = $region45
    $region44: #{tpu_custom_call.1} parent=1 // pred_region
      %290 = vsyncadd [#allocation5], 0
      %s292 = sshll.u32 [#allocation6], 4
      %s293 = int_to_ptr.vmem [resolvable:$true] %s292
      %s294 = sshll.u32 %s7, 4
      %s295 = int_to_ptr.hbm [resolvable:$true] %s294
      %297 = dma.vmem_to_hbm [thread:$0]  %s293, 128, %s295, [#allocation5]
    $region45: #{tpu_custom_call.1} parent=1 // pred_fallthru
      _
    // Predicated region
    $region46: #{tpu_custom_call.1} parent=1 // pred_check
      _
    $region47: #{tpu_custom_call.1} parent=1 // pred_check_branch
      %299 = sbr.rel (0) target = $region49
    $region48: #{tpu_custom_call.1} parent=1 // pred_region
      %301 = dma.done [#allocation5], 128
    $region49: #{tpu_custom_call.1} parent=1 // pred_fallthru
      _
    %302 = vsyncpa [#allocation4], 1
    %303 = vsyncpa [#allocation5], 1

</llo_original>
